<compile_context>
chip_gen: v7x
topology: tpu7x:2x2x1
jax: 0.10.0
libtpu: 0.0.40
codegen_flags: <defaults>
</compile_context>

<pallas_src>
import functools

import jax
import jax.numpy as jnp
from jax.experimental import pallas as pl
from jax.experimental.pallas import tpu as pltpu


IN_F = 2
HIDDEN = 32
OUT_F = 4
LANE_PAD = 128                      # lane-dense width for the hidden layer
HEAD_ROWS = 8                       # rows 0-1: w1, row 2: b1, row 3: b2, 4-7: pad
SLAB_ROWS = HEAD_ROWS + LANE_PAD    # + 128 rows of zero-padded w2


def _round_up(n, m):
    return ((n + m - 1) // m) * m


def pack_params(w1, b1, w2, b2):
    """Pack (2,32) w1, (32,) b1, (32,4) w2, (4,) b2 into one (136,128) f32 slab."""
    head = jnp.zeros((HEAD_ROWS, LANE_PAD), jnp.float32)
    head = head.at[0:IN_F, :HIDDEN].set(w1.astype(jnp.float32))
    head = head.at[2, :HIDDEN].set(b1.astype(jnp.float32))
    head = head.at[3, :OUT_F].set(b2.astype(jnp.float32))
    w2p = jnp.zeros((LANE_PAD, LANE_PAD), jnp.float32)
    w2p = w2p.at[:HIDDEN, :OUT_F].set(w2.astype(jnp.float32))
    return jnp.concatenate([head, w2p], axis=0)   # (136, 128)


def mlp_kernel(x_ref, p_ref, o_ref):
    x = x_ref[...]                      # (tb, 2) f32

    # Static views/loads from the packed parameter slab.
    w1_r0 = p_ref[0:1, :]               # (1, 128) row 0 of w1 (zero beyond 32)
    w1_r1 = p_ref[1:2, :]               # (1, 128) row 1 of w1
    b1 = p_ref[2:3, :]                  # (1, 128) bias 1 (zero beyond 32)
    b2 = p_ref[3:4, :]                  # (1, 128) bias 2 (zero beyond 4)
    w2 = p_ref[HEAD_ROWS:, :]           # (128, 128) zero rows beyond 32

    # Layer 1: K=2 contraction as two VPU FMAs (no MXU round trip), f32.
    h = x[:, 0:1] * w1_r0 + x[:, 1:2] * w1_r1 + b1     # (tb, 128)
    h = jnp.maximum(h, 0.0)                            # ReLU; padded lanes stay 0

    # Layer 2 on the MXU in bf16 (native path), f32 accumulate.  Zero-padded
    # hidden lanes / w2 rows keep the result exact w.r.t. the 32x4 matmul.
    y = jnp.dot(h.astype(jnp.bfloat16), w2.astype(jnp.bfloat16),
                preferred_element_type=jnp.float32) + b2   # (tb, 128)

    # Narrow store: only the OUT_F useful columns reach HBM.
    o_ref[...] = y[:, :OUT_F].astype(o_ref.dtype)          # (tb, 4)


@functools.partial(jax.jit, static_argnames=("tile_b",))
def mlp_forward(x, packed_params, *, tile_b=4096):
    B, in_f = x.shape
    assert in_f == IN_F

    # Batch tile: multiple of 8 rows; keep >= 2 grid steps when possible so the
    # "parallel" axis can be sharded across v7x's two TensorCores.
    tb = min(tile_b, max(8, _round_up(pl.cdiv(B, 2), 8)))
    num_tiles = pl.cdiv(B, tb)
    grid = (num_tiles,)

    # Advisory cost: padded MXU work + VPU layer 1, and the real bytes moved.
    flops = num_tiles * tb * (2 * LANE_PAD * LANE_PAD + 6 * LANE_PAD)
    bytes_accessed = (B * IN_F + SLAB_ROWS * LANE_PAD + B * OUT_F) * 4

    return pl.pallas_call(
        mlp_kernel,
        out_shape=jax.ShapeDtypeStruct((B, OUT_F), x.dtype),
        grid_spec=pltpu.PrefetchScalarGridSpec(
            num_scalar_prefetch=0,
            grid=grid,
            in_specs=[
                pl.BlockSpec((tb, IN_F), lambda i: (i, 0)),
                pl.BlockSpec((SLAB_ROWS, LANE_PAD), lambda i: (0, 0)),  # resident
            ],
            out_specs=pl.BlockSpec((tb, OUT_F), lambda i: (i, 0)),
        ),
        compiler_params=pltpu.CompilerParams(
            dimension_semantics=("parallel",),
        ),
        cost_estimate=pl.CostEstimate(
            flops=flops, transcendentals=0, bytes_accessed=bytes_accessed),
    )(x, packed_params)


def init_params(key):
    # Deterministic init mimicking PyTorch nn.Linear default (+/- 1/sqrt(fan_in)).
    k1, k2, k3, k4 = jax.random.split(key, 4)
    bound1 = 1.0 / jnp.sqrt(IN_F)
    bound2 = 1.0 / jnp.sqrt(HIDDEN)
    w1 = jax.random.uniform(k1, (IN_F, HIDDEN), jnp.float32, -bound1, bound1)
    b1 = jax.random.uniform(k2, (HIDDEN,), jnp.float32, -bound1, bound1)
    w2 = jax.random.uniform(k3, (HIDDEN, OUT_F), jnp.float32, -bound2, bound2)
    b2 = jax.random.uniform(k4, (OUT_F,), jnp.float32, -bound2, bound2)
    return w1, b1, w2, b2


if __name__ == "__main__":
    key = jax.random.PRNGKey(0)
    kx, kp = jax.random.split(key)

    w1, b1, w2, b2 = init_params(kp)
    params = pack_params(w1, b1, w2, b2)

    # batch=8 (tile-aligned) and batch=13 (exercises the ragged last tile).
    for batch in (8, 13):
        xb = jax.random.normal(jax.random.fold_in(kx, batch), (batch, IN_F),
                               jnp.float32)
        out = jax.block_until_ready(mlp_forward(xb, params))
        assert out.shape == (batch, OUT_F)

        # Full-f32 PyTorch-equivalent reference (loose: layer 2 runs in bf16).
        h_ref = jnp.maximum(xb @ w1 + b1, 0.0)
        ref_f32 = h_ref @ w2 + b2
        assert jnp.allclose(out, ref_f32, atol=5e-2, rtol=5e-2), (
            float(jnp.max(jnp.abs(out - ref_f32))))

        # bf16-matched reference (tight: same cast as the kernel's MXU path).
        ref_bf16 = jnp.dot(h_ref.astype(jnp.bfloat16), w2.astype(jnp.bfloat16),
                           preferred_element_type=jnp.float32) + b2
        assert jnp.allclose(out, ref_bf16, atol=1e-4, rtol=1e-4), (
            float(jnp.max(jnp.abs(out - ref_bf16))))

    print("KERNEL_OK")
</pallas_src>

<mosaic_0001>
module attributes {stable_mosaic.version = 11 : i64} {
  func.func @mlp_kernel(%arg0: i32, %arg1: memref<8x2xf32, #tpu.memory_space<vmem>>, %arg2: memref<136x128xf32, #tpu.memory_space<vmem>>, %arg3: memref<8x4xf32, #tpu.memory_space<vmem>>) attributes {dimension_semantics = [#tpu.dimension_semantics<parallel>], iteration_bounds = array<i64: 1>, scalar_prefetch = 0 : i64, scratch_operands = 0 : i64, tpu.core_type = #tpu.core_type<tc>, window_params = [{transform_indices = @transform_0, window_bounds = array<i64: 8, 2>}, {pipeline_mode = #tpu.pipeline_mode<synchronous>, transform_indices = @transform_1, window_bounds = array<i64: 136, 128>}, {transform_indices = @transform_2, window_bounds = array<i64: 8, 4>}]} {
    %c0 = arith.constant 0 : index
    %c0_0 = arith.constant 0 : index
    %0 = vector.load %arg1[%c0, %c0_0] : memref<8x2xf32, #tpu.memory_space<vmem>>, vector<8x2xf32>
    %c0_1 = arith.constant 0 : index
    %c0_2 = arith.constant 0 : index
    %1 = vector.load %arg2[%c0_1, %c0_2] : memref<136x128xf32, #tpu.memory_space<vmem>>, vector<1x128xf32>
    %c1 = arith.constant 1 : index
    %c0_3 = arith.constant 0 : index
    %2 = vector.load %arg2[%c1, %c0_3] : memref<136x128xf32, #tpu.memory_space<vmem>>, vector<1x128xf32>
    %c2 = arith.constant 2 : index
    %c0_4 = arith.constant 0 : index
    %3 = vector.load %arg2[%c2, %c0_4] : memref<136x128xf32, #tpu.memory_space<vmem>>, vector<1x128xf32>
    %c3 = arith.constant 3 : index
    %c0_5 = arith.constant 0 : index
    %4 = vector.load %arg2[%c3, %c0_5] : memref<136x128xf32, #tpu.memory_space<vmem>>, vector<1x128xf32>
    %c8 = arith.constant 8 : index
    %c0_6 = arith.constant 0 : index
    %5 = vector.load %arg2[%c8, %c0_6] : memref<136x128xf32, #tpu.memory_space<vmem>>, vector<128x128xf32>
    %6 = vector.extract_strided_slice %0 {offsets = [0, 0], sizes = [8, 1], strides = [1, 1]} : vector<8x2xf32> to vector<8x1xf32>
    %7 = vector.broadcast %6 : vector<8x1xf32> to vector<8x128xf32>
    %8 = vector.broadcast %1 : vector<1x128xf32> to vector<8x128xf32>
    %9 = arith.mulf %7, %8 : vector<8x128xf32>
    %10 = vector.extract_strided_slice %0 {offsets = [0, 1], sizes = [8, 1], strides = [1, 1]} : vector<8x2xf32> to vector<8x1xf32>
    %11 = vector.broadcast %10 : vector<8x1xf32> to vector<8x128xf32>
    %12 = vector.broadcast %2 : vector<1x128xf32> to vector<8x128xf32>
    %13 = arith.mulf %11, %12 : vector<8x128xf32>
    %14 = arith.addf %9, %13 : vector<8x128xf32>
    %15 = vector.broadcast %3 : vector<1x128xf32> to vector<8x128xf32>
    %16 = arith.addf %14, %15 : vector<8x128xf32>
    %cst = arith.constant 0.000000e+00 : f32
    %17 = vector.broadcast %cst : f32 to vector<8x128xf32>
    %18 = arith.maximumf %16, %17 : vector<8x128xf32>
    %19 = arith.truncf %18 : vector<8x128xf32> to vector<8x128xbf16>
    %20 = arith.truncf %5 : vector<128x128xf32> to vector<128x128xbf16>
    %cst_7 = arith.constant dense<0.000000e+00> : vector<8x128xf32>
    %21 = tpu.matmul %19, %20, %cst_7 {dimension_numbers = #tpu.dot_dimension_numbers<[1], [0], [0], [1], [0, 0, 1, 1], [], []>} : vector<8x128xbf16>, vector<128x128xbf16>, vector<8x128xf32> -> vector<8x128xf32>
    %22 = vector.broadcast %4 : vector<1x128xf32> to vector<8x128xf32>
    %23 = arith.addf %21, %22 : vector<8x128xf32>
    %24 = vector.extract_strided_slice %23 {offsets = [0, 0], sizes = [8, 4], strides = [1, 1]} : vector<8x128xf32> to vector<8x4xf32>
    %c0_8 = arith.constant 0 : index
    %c0_9 = arith.constant 0 : index
    %25 = vector.load %arg3[%c0_8, %c0_9] : memref<8x4xf32, #tpu.memory_space<vmem>>, vector<8x4xf32>
    tpu.vector_store %arg3[%c0_8, %c0_9], %24 {strides = array<i32>} : memref<8x4xf32, #tpu.memory_space<vmem>>, vector<8x4xf32>,
    return
  }
  func.func @transform_0(%arg0: i32) -> (i32, i32) {
    %c0_i32 = arith.constant 0 : i32
    %c0_i32_0 = arith.constant 0 : i32
    return %arg0, %c0_i32 : i32, i32
  }
  func.func @transform_1(%arg0: i32) -> (i32, i32) {
    %c0_i32 = arith.constant 0 : i32
    %c0_i32_0 = arith.constant 0 : i32
    %c0_i32_1 = arith.constant 0 : i32
    return %c0_i32, %c0_i32_0 : i32, i32
  }
  func.func @transform_2(%arg0: i32) -> (i32, i32) {
    %c0_i32 = arith.constant 0 : i32
    %c0_i32_0 = arith.constant 0 : i32
    return %arg0, %c0_i32 : i32, i32
  }
}

</mosaic_0001>

<llo_original>
// kernel: mlp_forward.1
$region0: #{mlp_forward.1}
  #allocation0 [shape = 'u32[]', space=smem, size = 0x4, offset = 0x4, fixed_abs, tag = 'smem constant byte address 0x4 - core index']
  #allocation1 [shape = 'u32[144,128]{1,0:T(1,128)}', space=vmem, size = 0x12000, scoped, tag = 'internal scratch']
  %s0 = inlined_call_operand.vmem [shape: f32[8,2], index: 0, kind: input, shape index: {}]
  %s1 = inlined_call_operand.hbm [shape: f32[136,128], index: 1, kind: input, shape index: {}]
  %s2 = inlined_call_operand.vmem [shape: f32[8,4], index: 2, kind: output, shape index: {}]
  %s3 = sld [smem:[#allocation0]]
  $region22: #{mlp_forward.1} parent=0
    _
  %s5 = ssub.s32 1, %s3
  %s6 = scalar_select 0, %s5, %s3
  $region1: #{mlp_forward.1} parent=0
    #allocation2 [shape = 'u8[69632]{0}', space=vmem, size = 0x11000, scoped, tag = 'input window, operand 1, single buffered']
    #allocation3 [shape = 's32[1]{0}', space=sflag, size = 0x4, scoped, tag = 'scoped memory for mlp_forward.1']
    %7 = vsyncpa [#allocation3], 0
    // Predicated region
    $region2: #{mlp_forward.1} parent=1 // pred_check
      _
    $region3: #{mlp_forward.1} parent=1 // pred_check_branch
      %9 = sbr.rel (0) target = $region5
    $region4: #{mlp_forward.1} parent=1 // pred_region
      _
    $region5: #{mlp_forward.1} parent=1 // pred_fallthru
      _
    // Predicated region
    $region6: #{mlp_forward.1} parent=1 // pred_check
      _
    $region7: #{mlp_forward.1} parent=1 // pred_check_branch
      %11 = sbr.rel (0) target = $region9
    $region8: #{mlp_forward.1} parent=1 // pred_region
      %s13 = ssub.s32 2176, 2176
      %14 = vsyncadd [#allocation3], %s13
      %s15 = sshll.u32 [#allocation2], 4
      %s16 = int_to_ptr.vmem [resolvable:$true] %s15
      %21 = dma.hbm_to_vmem [thread:$0]  %s1, 2176, %s16, [#allocation3], 128, 128, 8
    $region9: #{mlp_forward.1} parent=1 // pred_fallthru
      _
    // Predicated region
    $region10: #{mlp_forward.1} parent=1 // pred_check
      _
    $region11: #{mlp_forward.1} parent=1 // pred_check_branch
      %23 = sbr.rel (0) target = $region13
    $region12: #{mlp_forward.1} parent=1 // pred_region
      %24 = dma.done [#allocation3], 2176
    $region13: #{mlp_forward.1} parent=1 // pred_fallthru
      _
    %v26 = vld [vmem:[%s0] sm:$0xff]
    %v27 = vld [vmem:[#allocation2] sm:$0x1]
    %v28 = vld [vmem:[#allocation2 + $0x1] sm:$0x1]
    %v29 = vld [vmem:[#allocation2 + $0x2] sm:$0x1]
    %v30 = vld [vmem:[#allocation2 + $0x3] sm:$0x1]
    %v31 = vld [vmem:[#allocation2 + $0x8] sm:$0xff]
    %v32 = vld [vmem:[#allocation2 + $0x10] sm:$0xff]
    %v33 = vld [vmem:[#allocation2 + $0x18] sm:$0xff]
    %v34 = vld [vmem:[#allocation2 + $0x20] sm:$0xff]
    %v35 = vld [vmem:[#allocation2 + $0x28] sm:$0xff]
    %v36 = vld [vmem:[#allocation2 + $0x30] sm:$0xff]
    %v37 = vld [vmem:[#allocation2 + $0x38] sm:$0xff]
    %v38 = vld [vmem:[#allocation2 + $0x40] sm:$0xff]
    %v39 = vld [vmem:[#allocation2 + $0x48] sm:$0xff]
    %v40 = vld [vmem:[#allocation2 + $0x50] sm:$0xff]
    %v41 = vld [vmem:[#allocation2 + $0x58] sm:$0xff]
    %v42 = vld [vmem:[#allocation2 + $0x60] sm:$0xff]
    %v43 = vld [vmem:[#allocation2 + $0x68] sm:$0xff]
    %v44 = vld [vmem:[#allocation2 + $0x70] sm:$0xff]
    %v45 = vld [vmem:[#allocation2 + $0x78] sm:$0xff]
    %v46 = vld [vmem:[#allocation2 + $0x80] sm:$0xff]
    %48 = vset.pattern.permute.xlu0 0
    %49 = vperm.xlu0 %48, %v26
    %v50 = vpop.permute.xlu0 %49
    %v52 = vlaneseq
    %v53 = vshrl.u32 %v52, 7
    %v54 = vsub.s32 0, %v53
    %v55 = vrot.slane %v27, %v54
    %v56 = vmul.f32 %v50, %v55
    %57 = vset.pattern.permute.xlu0 1
    %58 = vperm.xlu0 %57, %v26
    %v59 = vpop.permute.xlu0 %58
    %v61 = vlaneseq
    %v62 = vshrl.u32 %v61, 7
    %v63 = vsub.s32 0, %v62
    %v64 = vrot.slane %v28, %v63
    %v65 = vmul.f32 %v59, %v64
    %v66 = vadd.f32 %v56, %v65
    %v67 = vlaneseq
    %v68 = vshrl.u32 %v67, 7
    %v69 = vsub.s32 0, %v68
    %v70 = vrot.slane %v29, %v69
    %v71 = vadd.f32 %v66, %v70
    %v72 = vmax.f32 %v71, 0.0
    %v73 = vpack.c.bf16 %v72, %v72
    %v74 = vpack.c.bf16 %v32, %v31
    %v75 = vpack.c.bf16 %v34, %v33
    %v76 = vpack.c.bf16 %v36, %v35
    %v77 = vpack.c.bf16 %v38, %v37
    %v78 = vpack.c.bf16 %v40, %v39
    %v79 = vpack.c.bf16 %v42, %v41
    %v80 = vpack.c.bf16 %v44, %v43
    %v81 = vpack.c.bf16 %v46, %v45
    %v82 = vlaneseq
    %v83 = vshrl.u32 %v82, 7
    %v84 = vsub.s32 0, %v83
    %v85 = vrot.slane %v30, %v84
    %86 = vmatprep.subr.bf16.mxu0 0
    %87 = vmatpush1.bf16.msra.mxu0 %v74
    %88 = vmatprep.subr.bf16.mxu0 0
    %89 = vmatpush1.bf16.msra.mxu0 %v75
    %90 = vmatprep.subr.bf16.mxu0 0
    %91 = vmatpush1.bf16.msra.mxu0 %v76
    %92 = vmatprep.subr.bf16.mxu0 0
    %93 = vmatpush1.bf16.msra.mxu0 %v77
    %94 = vmatprep.subr.bf16.mxu0 0
    %95 = vmatpush1.bf16.msra.mxu0 %v78
    %96 = vmatprep.subr.bf16.mxu0 0
    %97 = vmatpush1.bf16.msra.mxu0 %v79
    %98 = vmatprep.subr.bf16.mxu0 0
    %99 = vmatpush1.bf16.msra.mxu0 %v80
    %100 = vmatprep.subr.bf16.mxu0 0
    %101 = vmatpush1.bf16.msra.mxu0 %v81
    %102 = vmatprep.subr.bf16.mxu0 0
    %103 = vmatpush1.bf16.msra.mxu0 0
    %104 = vmatprep.subr.bf16.mxu0 0
    %105 = vmatpush1.bf16.msra.mxu0 0
    %106 = vmatprep.subr.bf16.mxu0 0
    %107 = vmatpush1.bf16.msra.mxu0 0
    %108 = vmatprep.subr.bf16.mxu0 0
    %109 = vmatpush1.bf16.msra.mxu0 0
    %110 = vmatprep.subr.bf16.mxu0 0
    %111 = vmatpush1.bf16.msra.mxu0 0
    %112 = vmatprep.subr.bf16.mxu0 0
    %113 = vmatpush1.bf16.msra.mxu0 0
    %114 = vmatprep.subr.bf16.mxu0 0
    %115 = vmatpush1.bf16.msra.mxu0 0
    %116 = vmatprep.subr.bf16.mxu0 0
    %117 = vmatpush1.bf16.msra.mxu0 0
    %118 = vmatprep.mubr.bf16.mxu0 0
    %119 = vmatmul.mubr.bf16.gmra.mrb[0].mxu0 %v73
    %v120 = vpop.f32.mrb[0].mxu0
    %v121 = vadd.f32 %v85, %v120
    %v122 = vpop.f32.mrb[0].mxu0
    %v123 = vpop.f32.mrb[0].mxu0
    %v124 = vpop.f32.mrb[0].mxu0
    %125 = vdwg.mxu0
    %vm126 = vcmask 31744
    %127 = vst.msk [vmem:[%s2] sm:$0xff] %vm126, %v121
    // Predicated region
    $region14: #{mlp_forward.1} parent=1 // pred_check
      _
    $region15: #{mlp_forward.1} parent=1 // pred_check_branch
      %129 = sbr.rel (0) target = $region17
    $region16: #{mlp_forward.1} parent=1 // pred_region
      _
    $region17: #{mlp_forward.1} parent=1 // pred_fallthru
      _
    // Predicated region
    $region18: #{mlp_forward.1} parent=1 // pred_check
      _
    $region19: #{mlp_forward.1} parent=1 // pred_check_branch
      %131 = sbr.rel (0) target = $region21
    $region20: #{mlp_forward.1} parent=1 // pred_region
      _
    $region21: #{mlp_forward.1} parent=1 // pred_fallthru
      _
    %132 = vsyncpa [#allocation3], 1

</llo_original>
